<compile_context>
chip_gen: v6e
topology: v6e:2x2x1
jax: 0.10.0
libtpu: 0.0.40
codegen_flags: <defaults>
</compile_context>

<pallas_src>
import jax
import jax.numpy as jnp
from jax.experimental import pallas as pl
from jax.experimental.pallas import tpu as pltpu


def _linear_out1_kernel(xt_ref, wt_ref, b_ref, o_ref):
    # xt_ref: (IN, TB) VMEM   wt_ref: (IN, 1) VMEM   b_ref: (1,) SMEM   o_ref: (1, TB) VMEM
    xt = xt_ref[...]                      # (IN, TB) f32, batch on lanes
    wt = wt_ref[...]                      # (IN, 1)  f32, broadcasts over lanes
    # OUT == 1: VPU multiply + short sublane reduction (IN=10 -> 2 stacked vregs).
    acc = jnp.sum(xt * wt, axis=0, keepdims=True)        # (1, TB) f32
    o_ref[...] = (acc + b_ref[0]).astype(o_ref.dtype)     # bias: scalar SMEM read; lane-dense store


def _choose_batch_tile(B, batch_tile):
    """Pick TB: full batch for small B; otherwise a multiple of 128 that yields
    >= 2 grid tiles (so v7x's two TensorCores both get work), capped at batch_tile."""
    if B < 256:
        return B                          # single full-extent block (always legal)
    tb = min(batch_tile, pl.cdiv(B, 2))
    tb = max(128, (tb // 128) * 128)      # lane-aligned; Pallas masks the partial last block
    return tb


def simple_model_forward(x, weight, bias, *, batch_tile=32768):
    """x: (B, 10) f32; weight: (1, 10) f32; bias: (1,) f32 -> (B, 1) f32."""
    B, IN = x.shape
    OUT = weight.shape[0]
    assert OUT == 1 and weight.shape == (OUT, IN) and bias.shape == (OUT,)

    # Feature-major views so batch lands on the 128-lane axis inside the kernel.
    xt = x.T                              # (IN, B)   -- single cheap wrapper transpose
    wt = weight.T                         # (IN, 1)   -- resident column, broadcasts over lanes

    TB = _choose_batch_tile(B, batch_tile)
    grid = (pl.cdiv(B, TB),)

    out_row = pl.pallas_call(
        _linear_out1_kernel,
        out_shape=jax.ShapeDtypeStruct((OUT, B), x.dtype),          # (1, B): lane-dense output
        grid=grid,
        in_specs=[
            pl.BlockSpec((IN, TB), lambda i: (0, i)),               # x^T: tiled over batch (lanes)
            pl.BlockSpec((IN, OUT), lambda i: (0, 0)),              # W^T: same tiny block each step
            pl.BlockSpec(memory_space=pltpu.MemorySpace.SMEM),      # bias: scalar in SMEM
        ],
        out_specs=pl.BlockSpec((OUT, TB), lambda i: (0, i)),
        compiler_params=pltpu.CompilerParams(
            # Batch tiles are independent -> shard across TensorCores on v7x; harmless on v5e/v6e.
            dimension_semantics=("parallel",),
        ),
    )(xt, wt, bias)

    return out_row.reshape(B, OUT)        # (1, B) -> (B, 1), matches nn.Linear output


if __name__ == "__main__":
    key = jax.random.PRNGKey(0)
    k_x, k_w, k_b, k_x2, k_x3 = jax.random.split(key, 5)

    IN, OUT = 10, 1

    # Deterministic parameter init (mimics PyTorch's U(-1/sqrt(fan_in), 1/sqrt(fan_in)))
    bound = 1.0 / jnp.sqrt(jnp.float32(IN))
    weight = jax.random.uniform(k_w, (OUT, IN), jnp.float32, -bound, bound)
    bias = jax.random.uniform(k_b, (OUT,), jnp.float32, -bound, bound)

    # Small batch consistent with the module's toy usage (single full-extent block).
    B = 8
    x = jax.random.normal(k_x, (B, IN), jnp.float32)
    y = simple_model_forward(x, weight, bias)
    jax.block_until_ready(y)
    y_ref = x @ weight.T + bias
    assert y.shape == (B, OUT)
    assert jnp.allclose(y, y_ref, atol=1e-5), "mismatch vs reference (small batch)"

    # Larger batch exercises the tiled / pipelined grid path (grid == 2, both cores on v7x).
    B2 = 4096
    x2 = jax.random.normal(k_x2, (B2, IN), jnp.float32)
    y2 = simple_model_forward(x2, weight, bias)
    jax.block_until_ready(y2)
    y2_ref = x2 @ weight.T + bias
    assert jnp.allclose(y2, y2_ref, atol=1e-5), "mismatch vs reference (tiled batch)"

    # Non-multiple-of-128 batch exercises the masked partial last tile.
    B3 = 1000
    x3 = jax.random.normal(k_x3, (B3, IN), jnp.float32)
    y3 = simple_model_forward(x3, weight, bias)
    jax.block_until_ready(y3)
    y3_ref = x3 @ weight.T + bias
    assert jnp.allclose(y3, y3_ref, atol=1e-5), "mismatch vs reference (partial tile)"

    print("KERNEL_OK")
</pallas_src>

<mosaic_0001>
module attributes {stable_mosaic.version = 11 : i64} {
  func.func @_linear_out1_kernel(%arg0: i32, %arg1: memref<10x8xf32, #tpu.memory_space<vmem>>, %arg2: memref<10x1xf32, #tpu.memory_space<vmem>>, %arg3: memref<1xf32, #tpu.memory_space<smem>>, %arg4: memref<1x8xf32, #tpu.memory_space<vmem>>) attributes {dimension_semantics = [#tpu.dimension_semantics<parallel>], iteration_bounds = array<i64: 1>, scalar_prefetch = 0 : i64, scratch_operands = 0 : i64, tpu.core_type = #tpu.core_type<tc>, window_params = [{transform_indices = @transform_0, window_bounds = array<i64: 10, 8>}, {pipeline_mode = #tpu.pipeline_mode<synchronous>, transform_indices = @transform_1, window_bounds = array<i64: 10, 1>}, {transform_indices = @transform_2, window_bounds = array<i64: 1>}, {transform_indices = @transform_3, window_bounds = array<i64: 1, 8>}]} {
    %c0 = arith.constant 0 : index
    %c0_0 = arith.constant 0 : index
    %0 = vector.load %arg1[%c0, %c0_0] : memref<10x8xf32, #tpu.memory_space<vmem>>, vector<10x8xf32>
    %c0_1 = arith.constant 0 : index
    %c0_2 = arith.constant 0 : index
    %1 = vector.load %arg2[%c0_1, %c0_2] : memref<10x1xf32, #tpu.memory_space<vmem>>, vector<10x1xf32>
    %2 = vector.broadcast %1 : vector<10x1xf32> to vector<10x8xf32>
    %3 = arith.mulf %0, %2 : vector<10x8xf32>
    %cst = arith.constant dense<0.000000e+00> : vector<8xf32>
    %4 = vector.multi_reduction <add>, %3, %cst [0] : vector<10x8xf32> to vector<8xf32>
    %5 = vector.shape_cast %4 : vector<8xf32> to vector<1x8xf32>
    %c0_3 = arith.constant 0 : index
    %6 = memref.load %arg3[%c0_3] : memref<1xf32, #tpu.memory_space<smem>>
    %7 = vector.broadcast %6 : f32 to vector<1x8xf32>
    %8 = arith.addf %5, %7 : vector<1x8xf32>
    %c0_4 = arith.constant 0 : index
    %c0_5 = arith.constant 0 : index
    %9 = vector.load %arg4[%c0_4, %c0_5] : memref<1x8xf32, #tpu.memory_space<vmem>>, vector<1x8xf32>
    tpu.vector_store %arg4[%c0_4, %c0_5], %8 {strides = array<i32>} : memref<1x8xf32, #tpu.memory_space<vmem>>, vector<1x8xf32>,
    return
  }
  func.func @transform_0(%arg0: i32) -> (i32, i32) {
    %c0_i32 = arith.constant 0 : i32
    %c0_i32_0 = arith.constant 0 : i32
    return %c0_i32, %arg0 : i32, i32
  }
  func.func @transform_1(%arg0: i32) -> (i32, i32) {
    %c0_i32 = arith.constant 0 : i32
    %c0_i32_0 = arith.constant 0 : i32
    %c0_i32_1 = arith.constant 0 : i32
    return %c0_i32, %c0_i32_0 : i32, i32
  }
  func.func @transform_2(%arg0: i32) -> i32 {
    %c0_i32 = arith.constant 0 : i32
    %c0_i32_0 = arith.constant 0 : i32
    return %c0_i32 : i32
  }
  func.func @transform_3(%arg0: i32) -> (i32, i32) {
    %c0_i32 = arith.constant 0 : i32
    %c0_i32_0 = arith.constant 0 : i32
    return %c0_i32, %arg0 : i32, i32
  }
}

</mosaic_0001>

<llo_original>
// kernel: tpu_custom_call.1
$region0: #{tpu_custom_call.1}
  #allocation0 [shape = 'u32[]', space=smem, size = 0x4, offset = 0x4, fixed_abs, tag = 'smem constant byte address 0x4 - core index']
  #allocation1 [shape = 'u32[144,128]{1,0:T(1,128)}', space=vmem, size = 0x12000, scoped, tag = 'internal scratch']
  #allocation2 [shape = 'f32[1]{0:T(128)S(6)}', space=smem, size = 0x200, scoped, tag = 'scoped memory for tpu_custom_call.1']
  %s0 = inlined_call_operand.vmem [shape: f32[10,8], index: 0, kind: input, shape index: {}]
  %s1 = inlined_call_operand.vmem [shape: f32[10,1], index: 1, kind: input, shape index: {}]
  %s2 = inlined_call_operand.<no memory space> [shape: f32[1], index: 2, kind: input, shape index: {}]
  %s3 = inlined_call_operand.hbm [shape: f32[1,8], index: 3, kind: output, shape index: {}]
  %s4 = sld [smem:[#allocation0]]
  $region22: #{tpu_custom_call.1} parent=0
    _
  %s6 = ssub.s32 1, %s4
  %s7 = scalar_select 0, %s6, %s4
  %8 = sst [smem:[#allocation2]] %s2
  $region1: #{tpu_custom_call.1} parent=0
    #allocation3 [shape = 'u8[512]{0}', space=vmem, size = 0x400, scoped, tag = 'output window, operand 0, single buffered']
    #allocation4 [shape = 's32[1]{0}', space=sflag, size = 0x4, scoped, tag = 'scoped memory for tpu_custom_call.1']
    %9 = vsyncpa [#allocation4], 0
    // Predicated region
    $region2: #{tpu_custom_call.1} parent=1 // pred_check
      _
    $region3: #{tpu_custom_call.1} parent=1 // pred_check_branch
      %11 = sbr.rel (0) target = $region5
    $region4: #{tpu_custom_call.1} parent=1 // pred_region
      _
    $region5: #{tpu_custom_call.1} parent=1 // pred_fallthru
      _
    // Predicated region
    $region6: #{tpu_custom_call.1} parent=1 // pred_check
      _
    $region7: #{tpu_custom_call.1} parent=1 // pred_check_branch
      %13 = sbr.rel (0) target = $region9
    $region8: #{tpu_custom_call.1} parent=1 // pred_region
      _
    $region9: #{tpu_custom_call.1} parent=1 // pred_fallthru
      _
    // Predicated region
    $region10: #{tpu_custom_call.1} parent=1 // pred_check
      _
    $region11: #{tpu_custom_call.1} parent=1 // pred_check_branch
      %15 = sbr.rel (0) target = $region13
    $region12: #{tpu_custom_call.1} parent=1 // pred_region
      _
    $region13: #{tpu_custom_call.1} parent=1 // pred_fallthru
      _
    %v16 = vld [vmem:[%s0] sm:$0xff]
    %v17 = vld [vmem:[%s0 + $0x8] sm:$0x3]
    %v18 = vld [vmem:[%s1] sm:$0xff]
    %v19 = vld [vmem:[%s1 + $0x8] sm:$0x3]
    %21 = vset.pattern.permute.xlu0 0
    %22 = vperm.xlu0 %21, %v18
    %v23 = vpop.permute.xlu0 %22
    %26 = vset.pattern.permute.xlu0 0
    %27 = vperm.xlu0 %26, %v19
    %v28 = vpop.permute.xlu0 %27
    %v30 = vmul.f32 %v16, %v23
    %v31 = vmul.f32 %v17, %v28
    %vm32 = vcmask 64512
    %v33 = vsel %vm32, %v30, 0.0
    %vm34 = vcmask 58368
    %v35 = vsel %vm34, %v31, 0.0
    %v36 = vadd.f32 %v33, %v35
    %v37 = vrot.slane %v36, 4
    %v38 = vadd.f32 %v36, %v37
    %v39 = vrot.slane %v38, 2
    %v40 = vadd.f32 %v38, %v39
    %v41 = vrot.slane %v40, 1
    %v42 = vadd.f32 %v40, %v41
    %s43 = sld [smem:[#allocation2]]
    %v44 = vstv %s43
    %v45 = vadd.f32 %v42, %v44
    %vm46 = vcmask 57344
    %47 = vst.msk [vmem:[#allocation3] sm:$0x1] %vm46, %v45
    // Predicated region
    $region14: #{tpu_custom_call.1} parent=1 // pred_check
      _
    $region15: #{tpu_custom_call.1} parent=1 // pred_check_branch
      %49 = sbr.rel (0) target = $region17
    $region16: #{tpu_custom_call.1} parent=1 // pred_region
      %s51 = ssub.s32 16, 16
      %52 = vsyncadd [#allocation4], %s51
      %s54 = sshll.u32 [#allocation3], 4
      %s55 = int_to_ptr.vmem [resolvable:$true] %s54
      %57 = dma.vmem_to_hbm [thread:$0]  %s55, 16, %s3, [#allocation4]
    $region17: #{tpu_custom_call.1} parent=1 // pred_fallthru
      _
    // Predicated region
    $region18: #{tpu_custom_call.1} parent=1 // pred_check
      _
    $region19: #{tpu_custom_call.1} parent=1 // pred_check_branch
      %59 = sbr.rel (0) target = $region21
    $region20: #{tpu_custom_call.1} parent=1 // pred_region
      %60 = dma.done [#allocation4], 16
    $region21: #{tpu_custom_call.1} parent=1 // pred_fallthru
      _
    %61 = vsyncpa [#allocation4], 1

</llo_original>
